<compile_context>
chip_gen: v7x
topology: tpu7x:2x2x1
jax: 0.10.0
libtpu: 0.0.40
codegen_flags: <defaults>
</compile_context>

<pallas_src>
import functools

import jax
import jax.numpy as jnp
from jax import lax
from jax.experimental import pallas as pl
from jax.experimental.pallas import tpu as pltpu


# ----------------------------- config --------------------------------------
IN_DIM = 32
HIDDEN_DIMS = [32, 16]          # encoder: 32->32->16 ; decoder (reversed): 16->32
LATENT_DIM = 8
LEAKY_SLOPE = 0.01              # nn.LeakyReLU default
LANES = 128                     # TPU lane width


def _leaky(h):
    return jnp.where(h > 0, h, LEAKY_SLOPE * h)


def _round_up(n, m):
    return (n + m - 1) // m * m


# ----------------------------- parameters ----------------------------------
def init_params(key, in_dim, hidden_dims, latent_dim):
    """Deterministic init. Weights are stored as [in, out], biases as [1, out]."""
    params = {"enc": [], "dec": []}

    def linear(key, fan_in, fan_out):
        kw, kb = jax.random.split(key)
        bound = 1.0 / jnp.sqrt(fan_in)
        W = jax.random.uniform(kw, (fan_in, fan_out), jnp.float32, -bound, bound)
        b = jax.random.uniform(kb, (1, fan_out), jnp.float32, -bound, bound)
        return W, b

    keys = jax.random.split(key, len(hidden_dims) + 4 + max(len(hidden_dims) - 1, 0))
    ki = 0

    d = in_dim
    for h in hidden_dims:
        params["enc"].append(linear(keys[ki], d, h)); ki += 1
        d = h
    params["fc_mu"] = linear(keys[ki], hidden_dims[-1], latent_dim); ki += 1
    params["fc_var"] = linear(keys[ki], hidden_dims[-1], latent_dim); ki += 1
    params["dec_in"] = linear(keys[ki], latent_dim, hidden_dims[-1]); ki += 1

    rev = list(reversed(hidden_dims))
    for i in range(len(rev) - 1):
        params["dec"].append(linear(keys[ki], rev[i], rev[i + 1])); ki += 1
    return params


def pack_params(params):
    """Pack every Linear into ONE (rows, 128) f32 slab (single input DMA).

    Effective layer order:
      enc_0 .. enc_{E-1},  fused [W_mu | W_var],  duplicated decoder_input
      [W_di ; W_di],  dec_0 .. dec_{D-1}.
    Weights are column-padded to 128 lanes and start at 8-aligned rows; each
    bias gets its own 8-row block (bias values in row 0). Returns
    (slab, meta) with meta[i] = (w_row, fan_in, b_row) as static Python ints.
    """
    eff = []
    for W, b in params["enc"]:
        eff.append((W, b))
    W_mu, b_mu = params["fc_mu"]
    W_var, b_var = params["fc_var"]
    eff.append((jnp.concatenate([W_mu, W_var], axis=1),
                jnp.concatenate([b_mu, b_var], axis=1)))
    W_di, b_di = params["dec_in"]
    eff.append((jnp.concatenate([W_di, W_di], axis=0), b_di))
    for W, b in params["dec"]:
        eff.append((W, b))

    blocks, w_info, b_info = [], [], []
    off = 0
    for W, _ in eff:                                   # weights first
        fan_in, fan_out = W.shape
        rows = _round_up(fan_in, 8)
        blk = jnp.zeros((rows, LANES), jnp.float32).at[:fan_in, :fan_out].set(W)
        blocks.append(blk)
        w_info.append((off, fan_in))
        off += rows
    for _, b in eff:                                   # then bias blocks
        fan_out = b.shape[-1]
        blk = jnp.zeros((8, LANES), jnp.float32).at[0:1, :fan_out].set(
            b.reshape(1, fan_out))
        blocks.append(blk)
        b_info.append(off)
        off += 8
    slab = jnp.concatenate(blocks, axis=0)
    meta = tuple((w_info[i][0], w_info[i][1], b_info[i]) for i in range(len(eff)))
    return slab, meta


# ----------------------------- Pallas kernel --------------------------------
def _vae_kernel(meta, num_enc, num_dec, latent_dim,
                x_ref, eps_ref, p_ref, out_ref):
    """Fused MutualVAE forward for the whole (concatenated) batch.

    x_ref   : (B, in_dim)  f32
    eps_ref : (B, 128)     f32 — U[0,1) in lanes [latent, 2*latent), 0 elsewhere
    p_ref   : (rows, 128)  f32 — packed parameter slab (see pack_params)
    out_ref : (B, 256)     f32 — lanes [0,128) = [mu | logvar | 0...],
                                  lanes [128,256) = [recon | 0...]
    """
    def affine(h, li):
        w_row, k, b_row = meta[li]
        hk = h[:, :k]                              # prefix-lane narrow (offset 0)
        W = p_ref[w_row:w_row + k, :]              # (k, 128), 8-aligned slab rows
        b = p_ref[b_row:b_row + 1, :]              # (1, 128), 8-aligned bias row
        return jnp.dot(hk, W, preferred_element_type=jnp.float32) + b

    li = 0
    h = x_ref[...]
    for _ in range(num_enc):                       # encoder: Linear + LeakyReLU
        h = _leaky(affine(h, li))
        li += 1

    # fused mu/logvar matmul: lanes [0,L) = mu, [L,2L) = logvar, else 0
    muvar = affine(h, li)
    li += 1
    out_ref[:, 0:LANES] = muvar                    # aligned 128-wide store

    # Reparameterize without any cross-lane shift:
    #   zcat lanes [0,L) = mu, [L,2L) = eps*std, else 0.
    # The duplicated decoder_input weight [W_di ; W_di] then computes
    #   mu @ W_di + (eps*std) @ W_di == (eps*std + mu) @ W_di == z @ W_di.
    lane = lax.broadcasted_iota(jnp.int32, muvar.shape, 1)
    mu_only = jnp.where(lane < latent_dim, muvar, 0.0)
    zcat = eps_ref[...] * jnp.exp(0.5 * muvar) + mu_only

    h = affine(zcat, li)                           # decoder_input (no activation)
    li += 1
    for _ in range(num_dec):                       # decoder: Linear + LeakyReLU
        h = _leaky(affine(h, li))
        li += 1

    out_ref[:, LANES:2 * LANES] = h                # recon in lanes [0, out_dim)


def vae_pipeline(x, eps_shifted, slab, meta, num_enc, num_dec, latent_dim):
    """One fused pallas_call: encode -> (mu, logvar) -> reparameterize -> decode.

    Gridless: total working set (~150 KiB) is far under VMEM on every
    generation. For large batches, add a 1-D grid over rows with
    dimension_semantics=("parallel",) to shard across v7x's two TensorCores.
    """
    B = x.shape[0]
    kernel = functools.partial(_vae_kernel, meta, num_enc, num_dec, latent_dim)
    vmem = pl.BlockSpec(memory_space=pltpu.MemorySpace.VMEM)
    return pl.pallas_call(
        kernel,
        out_shape=jax.ShapeDtypeStruct((B, 2 * LANES), jnp.float32),
        in_specs=[vmem, vmem, vmem],
        out_specs=vmem,
    )(x, eps_shifted, slab)


# ----------------------------- MutualVAE forward ----------------------------
def mutual_vae_forward(params, embs, train_links, left_ents, right_ents, key):
    num_enc = len(params["enc"])
    num_dec = len(params["dec"])
    out_dim = HIDDEN_DIMS[0]     # decoder output dim = reversed(hidden_dims)[-1]
    slab, meta = pack_params(params)

    # TODO(synk): fuse these gathers into the kernel with PrefetchScalarGridSpec
    # + pl.Element(1) row blocks once entity/batch counts grow.
    x = jnp.take(embs, train_links[:, 0], axis=0)
    y = jnp.take(embs, train_links[:, 1], axis=0)
    sampled_x = jnp.take(embs, left_ents, axis=0)
    sampled_y = jnp.take(embs, right_ents, axis=0)

    parts = [x, y, sampled_x, sampled_y]           # flow order: xy, yx, xx, yy
    sizes = [p.shape[0] for p in parts]
    offs = [0]
    for s in sizes:
        offs.append(offs[-1] + s)
    big_x = jnp.concatenate(parts, axis=0)
    B = big_x.shape[0]

    # eps ~ U[0,1) (torch.rand_like semantics), one draw for the fused batch.
    # TODO(synk): generate eps in-kernel with pltpu.prng_random_bits and emit it
    # in the packed output to drop this input DMA.
    eps = jax.random.uniform(key, (B, LATENT_DIM), jnp.float32)
    # place eps in lanes [L, 2L) so the kernel needs no cross-lane shift
    eps_shifted = jnp.pad(eps, ((0, 0), (LATENT_DIM, LANES - 2 * LATENT_DIM)))

    packed = vae_pipeline(big_x, eps_shifted, slab, meta,
                          num_enc, num_dec, LATENT_DIM)

    mu_all = packed[:, 0:LATENT_DIM]
    lv_all = packed[:, LATENT_DIM:2 * LATENT_DIM]
    rec_all = packed[:, LANES:LANES + out_dim]

    def seg(a, i):
        return a[offs[i]:offs[i + 1]]

    flow_order = ("xy", "yx", "xx", "yy")
    flows, eps_used = {}, {}
    for i, name in enumerate(flow_order):
        flows[name] = (parts[i], (seg(mu_all, i), seg(lv_all, i)), seg(rec_all, i))
        eps_used[name] = seg(eps, i)
    return flows, eps_used


# ----------------------------- pure-JAX reference ---------------------------
def _ref_pipeline(params, x, eps):
    h = x
    for W, b in params["enc"]:
        h = _leaky(h @ W + b)
    mu = h @ params["fc_mu"][0] + params["fc_mu"][1]
    logvar = h @ params["fc_var"][0] + params["fc_var"][1]
    z = eps * jnp.exp(0.5 * logvar) + mu
    h = z @ params["dec_in"][0] + params["dec_in"][1]
    for W, b in params["dec"]:
        h = _leaky(h @ W + b)
    return mu, logvar, h


# ----------------------------- main -----------------------------------------
if __name__ == "__main__":
    key = jax.random.PRNGKey(0)
    k_emb, k_param, k_links, k_left, k_right, k_eps = jax.random.split(key, 6)

    N_ENTS = 32
    N_LINKS = 8
    N_SAMPLED = 8

    embs = jax.random.normal(k_emb, (N_ENTS, IN_DIM), jnp.float32)
    train_links = jax.random.randint(k_links, (N_LINKS, 2), 0, N_ENTS, jnp.int32)
    left_ents = jax.random.randint(k_left, (N_SAMPLED,), 0, N_ENTS, jnp.int32)
    right_ents = jax.random.randint(k_right, (N_SAMPLED,), 0, N_ENTS, jnp.int32)

    params = init_params(k_param, IN_DIM, list(HIDDEN_DIMS), LATENT_DIM)

    flows, eps_used = mutual_vae_forward(
        params, embs, train_links, left_ents, right_ents, k_eps)
    jax.block_until_ready(flows)

    # correctness check vs. pure-JAX reference (same eps)
    for name in ("xy", "yx", "xx", "yy"):
        inp, (mu_k, lv_k), rec_k = flows[name]
        mu_r, lv_r, rec_r = _ref_pipeline(params, inp, eps_used[name])
        assert jnp.allclose(mu_k, mu_r, atol=1e-4, rtol=1e-4)
        assert jnp.allclose(lv_k, lv_r, atol=1e-4, rtol=1e-4)
        assert jnp.allclose(rec_k, rec_r, atol=1e-4, rtol=1e-4)

    print("KERNEL_OK")
</pallas_src>

<mosaic_0001>
module attributes {stable_mosaic.version = 11 : i64} {
  func.func @_vae_kernel(%arg0: memref<32x32xf32, #tpu.memory_space<vmem>>, %arg1: memref<32x128xf32, #tpu.memory_space<vmem>>, %arg2: memref<152x128xf32, #tpu.memory_space<vmem>>, %arg3: memref<32x256xf32, #tpu.memory_space<vmem>>) attributes {dimension_semantics = [], scalar_prefetch = 0 : i64, scratch_operands = 0 : i64, tpu.core_type = #tpu.core_type<tc>} {
    %c0 = arith.constant 0 : index
    %c0_0 = arith.constant 0 : index
    %0 = vector.load %arg0[%c0, %c0_0] : memref<32x32xf32, #tpu.memory_space<vmem>>, vector<32x32xf32>
    %c0_1 = arith.constant 0 : index
    %c0_2 = arith.constant 0 : index
    %1 = vector.load %arg2[%c0_1, %c0_2] : memref<152x128xf32, #tpu.memory_space<vmem>>, vector<32x128xf32>
    %c112 = arith.constant 112 : index
    %c0_3 = arith.constant 0 : index
    %2 = vector.load %arg2[%c112, %c0_3] : memref<152x128xf32, #tpu.memory_space<vmem>>, vector<1x128xf32>
    %cst = arith.constant dense<0.000000e+00> : vector<32x128xf32>
    %3 = tpu.matmul %0, %1, %cst {dimension_numbers = #tpu.dot_dimension_numbers<[1], [0], [0], [1], [0, 0, 1, 1], [], []>} : vector<32x32xf32>, vector<32x128xf32>, vector<32x128xf32> -> vector<32x128xf32>
    %4 = vector.broadcast %2 : vector<1x128xf32> to vector<32x128xf32>
    %5 = arith.addf %3, %4 : vector<32x128xf32>
    %cst_4 = arith.constant 0.000000e+00 : f32
    %6 = vector.broadcast %cst_4 : f32 to vector<32x128xf32>
    %7 = arith.cmpf ogt, %5, %6 : vector<32x128xf32>
    %cst_5 = arith.constant 0.00999999977 : f32
    %8 = vector.broadcast %cst_5 : f32 to vector<32x128xf32>
    %9 = arith.mulf %8, %5 : vector<32x128xf32>
    %10 = arith.select %7, %5, %9 : vector<32x128xi1>, vector<32x128xf32>
    %11 = vector.extract_strided_slice %10 {offsets = [0, 0], sizes = [32, 32], strides = [1, 1]} : vector<32x128xf32> to vector<32x32xf32>
    %c32 = arith.constant 32 : index
    %c0_6 = arith.constant 0 : index
    %12 = vector.load %arg2[%c32, %c0_6] : memref<152x128xf32, #tpu.memory_space<vmem>>, vector<32x128xf32>
    %c120 = arith.constant 120 : index
    %c0_7 = arith.constant 0 : index
    %13 = vector.load %arg2[%c120, %c0_7] : memref<152x128xf32, #tpu.memory_space<vmem>>, vector<1x128xf32>
    %cst_8 = arith.constant dense<0.000000e+00> : vector<32x128xf32>
    %14 = tpu.matmul %11, %12, %cst_8 {dimension_numbers = #tpu.dot_dimension_numbers<[1], [0], [0], [1], [0, 0, 1, 1], [], []>} : vector<32x32xf32>, vector<32x128xf32>, vector<32x128xf32> -> vector<32x128xf32>
    %15 = vector.broadcast %13 : vector<1x128xf32> to vector<32x128xf32>
    %16 = arith.addf %14, %15 : vector<32x128xf32>
    %cst_9 = arith.constant 0.000000e+00 : f32
    %17 = vector.broadcast %cst_9 : f32 to vector<32x128xf32>
    %18 = arith.cmpf ogt, %16, %17 : vector<32x128xf32>
    %cst_10 = arith.constant 0.00999999977 : f32
    %19 = vector.broadcast %cst_10 : f32 to vector<32x128xf32>
    %20 = arith.mulf %19, %16 : vector<32x128xf32>
    %21 = arith.select %18, %16, %20 : vector<32x128xi1>, vector<32x128xf32>
    %22 = vector.extract_strided_slice %21 {offsets = [0, 0], sizes = [32, 16], strides = [1, 1]} : vector<32x128xf32> to vector<32x16xf32>
    %c64 = arith.constant 64 : index
    %c0_11 = arith.constant 0 : index
    %23 = vector.load %arg2[%c64, %c0_11] : memref<152x128xf32, #tpu.memory_space<vmem>>, vector<16x128xf32>
    %c128 = arith.constant 128 : index
    %c0_12 = arith.constant 0 : index
    %24 = vector.load %arg2[%c128, %c0_12] : memref<152x128xf32, #tpu.memory_space<vmem>>, vector<1x128xf32>
    %cst_13 = arith.constant dense<0.000000e+00> : vector<32x128xf32>
    %25 = tpu.matmul %22, %23, %cst_13 {dimension_numbers = #tpu.dot_dimension_numbers<[1], [0], [0], [1], [0, 0, 1, 1], [], []>} : vector<32x16xf32>, vector<16x128xf32>, vector<32x128xf32> -> vector<32x128xf32>
    %26 = vector.broadcast %24 : vector<1x128xf32> to vector<32x128xf32>
    %27 = arith.addf %25, %26 : vector<32x128xf32>
    %c0_14 = arith.constant 0 : index
    %c0_15 = arith.constant 0 : index
    %28 = vector.load %arg3[%c0_14, %c0_15] : memref<32x256xf32, #tpu.memory_space<vmem>>, vector<32x128xf32>
    tpu.vector_store %arg3[%c0_14, %c0_15], %27 {strides = array<i32>} : memref<32x256xf32, #tpu.memory_space<vmem>>, vector<32x128xf32>,
    %29 = tpu.iota {dimensions = array<i32: 1>} : vector<32x128xi32>
    %c8_i32 = arith.constant 8 : i32
    %30 = vector.broadcast %c8_i32 : i32 to vector<32x128xi32>
    %31 = arith.cmpi slt, %29, %30 : vector<32x128xi32>
    %cst_16 = arith.constant 0.000000e+00 : f32
    %32 = vector.broadcast %cst_16 : f32 to vector<32x128xf32>
    %33 = arith.select %31, %27, %32 : vector<32x128xi1>, vector<32x128xf32>
    %c0_17 = arith.constant 0 : index
    %c0_18 = arith.constant 0 : index
    %34 = vector.load %arg1[%c0_17, %c0_18] : memref<32x128xf32, #tpu.memory_space<vmem>>, vector<32x128xf32>
    %cst_19 = arith.constant 5.000000e-01 : f32
    %35 = vector.broadcast %cst_19 : f32 to vector<32x128xf32>
    %36 = arith.mulf %35, %27 : vector<32x128xf32>
    %37 = math.exp %36 : vector<32x128xf32>
    %38 = arith.mulf %34, %37 : vector<32x128xf32>
    %39 = arith.addf %38, %33 : vector<32x128xf32>
    %40 = vector.extract_strided_slice %39 {offsets = [0, 0], sizes = [32, 16], strides = [1, 1]} : vector<32x128xf32> to vector<32x16xf32>
    %c80 = arith.constant 80 : index
    %c0_20 = arith.constant 0 : index
    %41 = vector.load %arg2[%c80, %c0_20] : memref<152x128xf32, #tpu.memory_space<vmem>>, vector<16x128xf32>
    %c136 = arith.constant 136 : index
    %c0_21 = arith.constant 0 : index
    %42 = vector.load %arg2[%c136, %c0_21] : memref<152x128xf32, #tpu.memory_space<vmem>>, vector<1x128xf32>
    %cst_22 = arith.constant dense<0.000000e+00> : vector<32x128xf32>
    %43 = tpu.matmul %40, %41, %cst_22 {dimension_numbers = #tpu.dot_dimension_numbers<[1], [0], [0], [1], [0, 0, 1, 1], [], []>} : vector<32x16xf32>, vector<16x128xf32>, vector<32x128xf32> -> vector<32x128xf32>
    %44 = vector.broadcast %42 : vector<1x128xf32> to vector<32x128xf32>
    %45 = arith.addf %43, %44 : vector<32x128xf32>
    %46 = vector.extract_strided_slice %45 {offsets = [0, 0], sizes = [32, 16], strides = [1, 1]} : vector<32x128xf32> to vector<32x16xf32>
    %c96 = arith.constant 96 : index
    %c0_23 = arith.constant 0 : index
    %47 = vector.load %arg2[%c96, %c0_23] : memref<152x128xf32, #tpu.memory_space<vmem>>, vector<16x128xf32>
    %c144 = arith.constant 144 : index
    %c0_24 = arith.constant 0 : index
    %48 = vector.load %arg2[%c144, %c0_24] : memref<152x128xf32, #tpu.memory_space<vmem>>, vector<1x128xf32>
    %cst_25 = arith.constant dense<0.000000e+00> : vector<32x128xf32>
    %49 = tpu.matmul %46, %47, %cst_25 {dimension_numbers = #tpu.dot_dimension_numbers<[1], [0], [0], [1], [0, 0, 1, 1], [], []>} : vector<32x16xf32>, vector<16x128xf32>, vector<32x128xf32> -> vector<32x128xf32>
    %50 = vector.broadcast %48 : vector<1x128xf32> to vector<32x128xf32>
    %51 = arith.addf %49, %50 : vector<32x128xf32>
    %cst_26 = arith.constant 0.000000e+00 : f32
    %52 = vector.broadcast %cst_26 : f32 to vector<32x128xf32>
    %53 = arith.cmpf ogt, %51, %52 : vector<32x128xf32>
    %cst_27 = arith.constant 0.00999999977 : f32
    %54 = vector.broadcast %cst_27 : f32 to vector<32x128xf32>
    %55 = arith.mulf %54, %51 : vector<32x128xf32>
    %56 = arith.select %53, %51, %55 : vector<32x128xi1>, vector<32x128xf32>
    %c0_28 = arith.constant 0 : index
    %c128_29 = arith.constant 128 : index
    %57 = vector.load %arg3[%c0_28, %c128_29] : memref<32x256xf32, #tpu.memory_space<vmem>>, vector<32x128xf32>
    tpu.vector_store %arg3[%c0_28, %c128_29], %56 {strides = array<i32>} : memref<32x256xf32, #tpu.memory_space<vmem>>, vector<32x128xf32>,
    return
  }
}

</mosaic_0001>

<llo_original>
// kernel: tpu_custom_call.1
$region0: #{tpu_custom_call.1}
  #allocation0 [shape = 'u32[]', space=smem, size = 0x4, offset = 0x4, fixed_abs, tag = 'smem constant byte address 0x4 - core index']
  #allocation1 [shape = 'u32[144,128]{1,0:T(1,128)}', space=vmem, size = 0x12000, scoped, tag = 'internal scratch']
  %s0 = inlined_call_operand.hbm [shape: f32[32,32], index: 0, kind: input, shape index: {}]
  %s1 = inlined_call_operand.hbm [shape: f32[32,128], index: 1, kind: input, shape index: {}]
  %s2 = inlined_call_operand.hbm [shape: f32[152,128], index: 2, kind: input, shape index: {}]
  %s3 = inlined_call_operand.hbm [shape: f32[32,256], index: 3, kind: output, shape index: {}]
  %s4 = sld [smem:[#allocation0]]
  $region34: #{tpu_custom_call.1} parent=0
    _
  %s6 = ssub.s32 1, %s4
  %s7 = scalar_select 0, %s6, %s4
  $region1: #{tpu_custom_call.1} parent=0
    #allocation2 [shape = 'u8[16384]{0}', space=vmem, size = 0x4000, scoped, tag = 'input window, operand 0, single buffered']
    #allocation3 [shape = 's32[1]{0}', space=sflag, size = 0x4, scoped, tag = 'scoped memory for tpu_custom_call.1']
    #allocation4 [shape = 's32[1]{0}', space=sflag, size = 0x4, scoped, tag = 'scoped memory for tpu_custom_call.1']
    #allocation5 [shape = 'u8[16384]{0}', space=vmem, size = 0x4000, scoped, tag = 'input window, operand 1, single buffered']
    #allocation6 [shape = 's32[1]{0}', space=sflag, size = 0x4, scoped, tag = 'scoped memory for tpu_custom_call.1']
    #allocation7 [shape = 'u8[77824]{0}', space=vmem, size = 0x13000, scoped, tag = 'input window, operand 2, single buffered']
    #allocation8 [shape = 'u8[32768]{0}', space=vmem, size = 0x8000, scoped, tag = 'output window, operand 0, single buffered']
    %8 = vsyncpa [#allocation3], 0
    %9 = vsyncpa [#allocation6], 0
    %10 = vsyncpa [#allocation4], 0
    // Predicated region
    $region2: #{tpu_custom_call.1} parent=1 // pred_check
      _
    $region3: #{tpu_custom_call.1} parent=1 // pred_check_branch
      %12 = sbr.rel (0) target = $region5
    $region4: #{tpu_custom_call.1} parent=1 // pred_region
      %s14 = ssub.s32 512, 512
      %15 = vsyncadd [#allocation3], %s14
      %s16 = sshll.u32 [#allocation2], 4
      %s17 = int_to_ptr.vmem [resolvable:$true] %s16
      %22 = dma.hbm_to_vmem [thread:$0]  %s0, 512, %s17, [#allocation3], 128, 128, 8
    $region5: #{tpu_custom_call.1} parent=1 // pred_fallthru
      _
    // Predicated region
    $region6: #{tpu_custom_call.1} parent=1 // pred_check
      _
    $region7: #{tpu_custom_call.1} parent=1 // pred_check_branch
      %24 = sbr.rel (0) target = $region9
    $region8: #{tpu_custom_call.1} parent=1 // pred_region
      %s26 = ssub.s32 512, 512
      %27 = vsyncadd [#allocation6], %s26
      %s28 = sshll.u32 [#allocation5], 4
      %s29 = int_to_ptr.vmem [resolvable:$true] %s28
      %34 = dma.hbm_to_vmem [thread:$0]  %s1, 512, %s29, [#allocation6], 128, 128, 8
    $region9: #{tpu_custom_call.1} parent=1 // pred_fallthru
      _
    // Predicated region
    $region10: #{tpu_custom_call.1} parent=1 // pred_check
      _
    $region11: #{tpu_custom_call.1} parent=1 // pred_check_branch
      %36 = sbr.rel (0) target = $region13
    $region12: #{tpu_custom_call.1} parent=1 // pred_region
      %s38 = ssub.s32 2432, 2432
      %39 = vsyncadd [#allocation6], %s38
      %s40 = sshll.u32 [#allocation7], 4
      %s41 = int_to_ptr.vmem [resolvable:$true] %s40
      %46 = dma.hbm_to_vmem [thread:$0]  %s2, 2432, %s41, [#allocation6], 128, 128, 8
    $region13: #{tpu_custom_call.1} parent=1 // pred_fallthru
      _
    // Predicated region
    $region14: #{tpu_custom_call.1} parent=1 // pred_check
      _
    $region15: #{tpu_custom_call.1} parent=1 // pred_check_branch
      %48 = sbr.rel (0) target = $region17
    $region16: #{tpu_custom_call.1} parent=1 // pred_region
      %49 = dma.done [#allocation3], 512
    $region17: #{tpu_custom_call.1} parent=1 // pred_fallthru
      _
    // Predicated region
    $region18: #{tpu_custom_call.1} parent=1 // pred_check
      _
    $region19: #{tpu_custom_call.1} parent=1 // pred_check_branch
      %51 = sbr.rel (0) target = $region21
    $region20: #{tpu_custom_call.1} parent=1 // pred_region
      %52 = dma.done [#allocation6], 512
    $region21: #{tpu_custom_call.1} parent=1 // pred_fallthru
      _
    // Predicated region
    $region22: #{tpu_custom_call.1} parent=1 // pred_check
      _
    $region23: #{tpu_custom_call.1} parent=1 // pred_check_branch
      %54 = sbr.rel (0) target = $region25
    $region24: #{tpu_custom_call.1} parent=1 // pred_region
      %55 = dma.done [#allocation6], 2432
    $region25: #{tpu_custom_call.1} parent=1 // pred_fallthru
      _
    %v56 = vld [vmem:[#allocation2] sm:$0xff]
    %v57 = vld [vmem:[#allocation2 + $0x8] sm:$0xff]
    %v58 = vld [vmem:[#allocation2 + $0x10] sm:$0xff]
    %v59 = vld [vmem:[#allocation2 + $0x18] sm:$0xff]
    %v60 = vld [vmem:[#allocation7] sm:$0xff]
    %v61 = vld [vmem:[#allocation7 + $0x8] sm:$0xff]
    %v62 = vld [vmem:[#allocation7 + $0x10] sm:$0xff]
    %v63 = vld [vmem:[#allocation7 + $0x18] sm:$0xff]
    %v64 = vld [vmem:[#allocation7 + $0x70] sm:$0x1]
    %v65 = vlaneseq
    %v66 = vshrl.u32 %v65, 7
    %v67 = vsub.s32 0, %v66
    %v68 = vrot.slane %v64, %v67
    %vm69 = vcmask 261120
    %v71 = vsel %vm69, %v56, 0
    %v74 = vsel %vm69, %v57, 0
    %v77 = vsel %vm69, %v58, 0
    %v80 = vsel %vm69, %v59, 0
    %82 = vmatprep.subr.mxu0 0.0
    %83 = vmatpush1.msra.mxu0 %v60
    %84 = vmatprep.subr.mxu0 0.0
    %85 = vmatpush1.msra.mxu0 %v61
    %86 = vmatprep.subr.mxu0 0.0
    %87 = vmatpush1.msra.mxu0 %v62
    %88 = vmatprep.subr.mxu0 0.0
    %89 = vmatpush1.msra.mxu0 %v63
    %90 = vmatprep.subr.mxu0 0.0
    %91 = vmatpush1.msra.mxu0 0.0
    %92 = vmatprep.subr.mxu0 0.0
    %93 = vmatpush1.msra.mxu0 0.0
    %94 = vmatprep.subr.mxu0 0.0
    %95 = vmatpush1.msra.mxu0 0.0
    %96 = vmatprep.subr.mxu0 0.0
    %97 = vmatpush1.msra.mxu0 0.0
    %98 = vmatprep.subr.mxu0 0.0
    %99 = vmatpush1.msra.mxu0 0.0
    %100 = vmatprep.subr.mxu0 0.0
    %101 = vmatpush1.msra.mxu0 0.0
    %102 = vmatprep.subr.mxu0 0.0
    %103 = vmatpush1.msra.mxu0 0.0
    %104 = vmatprep.subr.mxu0 0.0
    %105 = vmatpush1.msra.mxu0 0.0
    %106 = vmatprep.subr.mxu0 0.0
    %107 = vmatpush1.msra.mxu0 0.0
    %108 = vmatprep.subr.mxu0 0.0
    %109 = vmatpush1.msra.mxu0 0.0
    %110 = vmatprep.subr.mxu0 0.0
    %111 = vmatpush1.msra.mxu0 0.0
    %112 = vmatprep.subr.mxu0 0.0
    %113 = vmatpush1.msra.mxu0 0.0
    %114 = vmatprep.subr.mxu0 0.0
    %115 = vmatpush1.msra.mxu0 0.0
    %116 = vmatprep.subr.mxu0 0.0
    %117 = vmatpush1.msra.mxu0 0.0
    %118 = vmatprep.subr.mxu0 0.0
    %119 = vmatpush1.msra.mxu0 0.0
    %120 = vmatprep.subr.mxu0 0.0
    %121 = vmatpush1.msra.mxu0 0.0
    %122 = vmatprep.subr.mxu0 0.0
    %123 = vmatpush1.msra.mxu0 0.0
    %124 = vmatprep.subr.mxu0 0.0
    %125 = vmatpush1.msra.mxu0 0.0
    %126 = vmatprep.subr.mxu0 0.0
    %127 = vmatpush1.msra.mxu0 0.0
    %128 = vmatprep.subr.mxu0 0.0
    %129 = vmatpush1.msra.mxu0 0.0
    %130 = vmatprep.subr.mxu0 0.0
    %131 = vmatpush1.msra.mxu0 0.0
    %132 = vmatprep.subr.mxu0 0.0
    %133 = vmatpush1.msra.mxu0 0.0
    %134 = vmatprep.subr.mxu0 0.0
    %135 = vmatpush1.msra.mxu0 0.0
    %136 = vmatprep.subr.mxu0 0.0
    %137 = vmatpush1.msra.mxu0 0.0
    %138 = vmatprep.subr.mxu0 0.0
    %139 = vmatpush1.msra.mxu0 0.0
    %140 = vmatprep.subr.mxu0 0.0
    %141 = vmatpush1.msra.mxu0 0.0
    %142 = vmatprep.subr.mxu0 0.0
    %143 = vmatpush1.msra.mxu0 0.0
    %144 = vmatprep.subr.mxu0 0.0
    %145 = vmatpush1.msra.mxu0 0.0
    %146 = vmatprep.mubr.f32.mxu0 0.0
    %147 = vmatmul.mubr.f32.gmra.mrb[0].mxu0 %v71
    %v148 = vpop.f32.mrb[0].mxu0
    %v149 = vadd.f32 %v68, %v148
    %v150 = vpop.f32.mrb[0].mxu0
    %151 = vmatprep.mubr.f32.mxu0 0.0
    %152 = vmatmul.mubr.f32.gmra.mrb[0].mxu0 %v74
    %v153 = vpop.f32.mrb[0].mxu0
    %v154 = vadd.f32 %v68, %v153
    %v155 = vpop.f32.mrb[0].mxu0
    %156 = vmatprep.mubr.f32.mxu0 0.0
    %157 = vmatmul.mubr.f32.gmra.mrb[0].mxu0 %v77
    %v158 = vpop.f32.mrb[0].mxu0
    %v159 = vadd.f32 %v68, %v158
    %v160 = vpop.f32.mrb[0].mxu0
    %161 = vmatprep.mubr.f32.mxu0 0.0
    %162 = vmatmul.mubr.f32.gmra.mrb[0].mxu0 %v80
    %v163 = vpop.f32.mrb[0].mxu0
    %v164 = vadd.f32 %v68, %v163
    %v165 = vpop.f32.mrb[0].mxu0
    %166 = vdwg.mxu0
    %vm167 = vcmp.gt.f32.partialorder %v149, 0.0
    %vm168 = vcmp.gt.f32.partialorder %v154, 0.0
    %vm169 = vcmp.gt.f32.partialorder %v159, 0.0
    %vm170 = vcmp.gt.f32.partialorder %v164, 0.0
    %v171 = vmul.f32 %v149, 0.01
    %v172 = vmul.f32 %v154, 0.01
    %v173 = vmul.f32 %v159, 0.01
    %v174 = vmul.f32 %v164, 0.01
    %v175 = vsel %vm167, %v149, %v171
    %v176 = vsel %vm168, %v154, %v172
    %v177 = vsel %vm169, %v159, %v173
    %v178 = vsel %vm170, %v164, %v174
    %v179 = vld [vmem:[#allocation7 + $0x20] sm:$0xff]
    %v180 = vld [vmem:[#allocation7 + $0x28] sm:$0xff]
    %v181 = vld [vmem:[#allocation7 + $0x30] sm:$0xff]
    %v182 = vld [vmem:[#allocation7 + $0x38] sm:$0xff]
    %v183 = vld [vmem:[#allocation7 + $0x78] sm:$0x1]
    %v184 = vlaneseq
    %v185 = vshrl.u32 %v184, 7
    %v186 = vsub.s32 0, %v185
    %v187 = vrot.slane %v183, %v186
    %v189 = vsel %vm69, %v175, 0
    %v192 = vsel %vm69, %v176, 0
    %v195 = vsel %vm69, %v177, 0
    %v198 = vsel %vm69, %v178, 0
    %200 = vmatprep.subr.mxu0 0.0
    %201 = vmatpush1.msra.mxu0 %v179
    %202 = vmatprep.subr.mxu0 0.0
    %203 = vmatpush1.msra.mxu0 %v180
    %204 = vmatprep.subr.mxu0 0.0
    %205 = vmatpush1.msra.mxu0 %v181
    %206 = vmatprep.subr.mxu0 0.0
    %207 = vmatpush1.msra.mxu0 %v182
    %208 = vmatprep.subr.mxu0 0.0
    %209 = vmatpush1.msra.mxu0 0.0
    %210 = vmatprep.subr.mxu0 0.0
    %211 = vmatpush1.msra.mxu0 0.0
    %212 = vmatprep.subr.mxu0 0.0
    %213 = vmatpush1.msra.mxu0 0.0
    %214 = vmatprep.subr.mxu0 0.0
    %215 = vmatpush1.msra.mxu0 0.0
    %216 = vmatprep.subr.mxu0 0.0
    %217 = vmatpush1.msra.mxu0 0.0
    %218 = vmatprep.subr.mxu0 0.0
    %219 = vmatpush1.msra.mxu0 0.0
    %220 = vmatprep.subr.mxu0 0.0
    %221 = vmatpush1.msra.mxu0 0.0
    %222 = vmatprep.subr.mxu0 0.0
    %223 = vmatpush1.msra.mxu0 0.0
    %224 = vmatprep.subr.mxu0 0.0
    %225 = vmatpush1.msra.mxu0 0.0
    %226 = vmatprep.subr.mxu0 0.0
    %227 = vmatpush1.msra.mxu0 0.0
    %228 = vmatprep.subr.mxu0 0.0
    %229 = vmatpush1.msra.mxu0 0.0
    %230 = vmatprep.subr.mxu0 0.0
    %231 = vmatpush1.msra.mxu0 0.0
    %232 = vmatprep.subr.mxu0 0.0
    %233 = vmatpush1.msra.mxu0 0.0
    %234 = vmatprep.subr.mxu0 0.0
    %235 = vmatpush1.msra.mxu0 0.0
    %236 = vmatprep.subr.mxu0 0.0
    %237 = vmatpush1.msra.mxu0 0.0
    %238 = vmatprep.subr.mxu0 0.0
    %239 = vmatpush1.msra.mxu0 0.0
    %240 = vmatprep.subr.mxu0 0.0
    %241 = vmatpush1.msra.mxu0 0.0
    %242 = vmatprep.subr.mxu0 0.0
    %243 = vmatpush1.msra.mxu0 0.0
    %244 = vmatprep.subr.mxu0 0.0
    %245 = vmatpush1.msra.mxu0 0.0
    %246 = vmatprep.subr.mxu0 0.0
    %247 = vmatpush1.msra.mxu0 0.0
    %248 = vmatprep.subr.mxu0 0.0
    %249 = vmatpush1.msra.mxu0 0.0
    %250 = vmatprep.subr.mxu0 0.0
    %251 = vmatpush1.msra.mxu0 0.0
    %252 = vmatprep.subr.mxu0 0.0
    %253 = vmatpush1.msra.mxu0 0.0
    %254 = vmatprep.subr.mxu0 0.0
    %255 = vmatpush1.msra.mxu0 0.0
    %256 = vmatprep.subr.mxu0 0.0
    %257 = vmatpush1.msra.mxu0 0.0
    %258 = vmatprep.subr.mxu0 0.0
    %259 = vmatpush1.msra.mxu0 0.0
    %260 = vmatprep.subr.mxu0 0.0
    %261 = vmatpush1.msra.mxu0 0.0
    %262 = vmatprep.subr.mxu0 0.0
    %263 = vmatpush1.msra.mxu0 0.0
    %264 = vmatprep.mubr.f32.mxu0 0.0
    %265 = vmatmul.mubr.f32.gmra.mrb[0].mxu0 %v189
    %v266 = vpop.f32.mrb[0].mxu0
    %v267 = vadd.f32 %v187, %v266
    %v268 = vpop.f32.mrb[0].mxu0
    %269 = vmatprep.mubr.f32.mxu0 0.0
    %270 = vmatmul.mubr.f32.gmra.mrb[0].mxu0 %v192
    %v271 = vpop.f32.mrb[0].mxu0
    %v272 = vadd.f32 %v187, %v271
    %v273 = vpop.f32.mrb[0].mxu0
    %274 = vmatprep.mubr.f32.mxu0 0.0
    %275 = vmatmul.mubr.f32.gmra.mrb[0].mxu0 %v195
    %v276 = vpop.f32.mrb[0].mxu0
    %v277 = vadd.f32 %v187, %v276
    %v278 = vpop.f32.mrb[0].mxu0
    %279 = vmatprep.mubr.f32.mxu0 0.0
    %280 = vmatmul.mubr.f32.gmra.mrb[0].mxu0 %v198
    %v281 = vpop.f32.mrb[0].mxu0
    %v282 = vadd.f32 %v187, %v281
    %v283 = vpop.f32.mrb[0].mxu0
    %284 = vdwg.mxu0
    %vm285 = vcmp.gt.f32.partialorder %v267, 0.0
    %vm286 = vcmp.gt.f32.partialorder %v272, 0.0
    %vm287 = vcmp.gt.f32.partialorder %v277, 0.0
    %vm288 = vcmp.gt.f32.partialorder %v282, 0.0
    %v289 = vmul.f32 %v267, 0.01
    %v290 = vmul.f32 %v272, 0.01
    %v291 = vmul.f32 %v277, 0.01
    %v292 = vmul.f32 %v282, 0.01
    %v293 = vsel %vm285, %v267, %v289
    %v294 = vsel %vm286, %v272, %v290
    %v295 = vsel %vm287, %v277, %v291
    %v296 = vsel %vm288, %v282, %v292
    %v297 = vld [vmem:[#allocation7 + $0x40] sm:$0xff]
    %v298 = vld [vmem:[#allocation7 + $0x48] sm:$0xff]
    %v299 = vld [vmem:[#allocation7 + $0x80] sm:$0x1]
    %v300 = vlaneseq
    %v301 = vshrl.u32 %v300, 7
    %v302 = vsub.s32 0, %v301
    %v303 = vrot.slane %v299, %v302
    %vm304 = vcmask 130048
    %v306 = vsel %vm304, %v293, 0
    %v309 = vsel %vm304, %v294, 0
    %v312 = vsel %vm304, %v295, 0
    %v315 = vsel %vm304, %v296, 0
    %317 = vmatprep.subr.mxu0 0.0
    %318 = vmatpush1.msra.mxu0 %v297
    %319 = vmatprep.subr.mxu0 0.0
    %320 = vmatpush1.msra.mxu0 %v298
    %321 = vmatprep.subr.mxu0 0.0
    %322 = vmatpush1.msra.mxu0 0.0
    %323 = vmatprep.subr.mxu0 0.0
    %324 = vmatpush1.msra.mxu0 0.0
    %325 = vmatprep.subr.mxu0 0.0
    %326 = vmatpush1.msra.mxu0 0.0
    %327 = vmatprep.subr.mxu0 0.0
    %328 = vmatpush1.msra.mxu0 0.0
    %329 = vmatprep.subr.mxu0 0.0
    %330 = vmatpush1.msra.mxu0 0.0
    %331 = vmatprep.subr.mxu0 0.0
    %332 = vmatpush1.msra.mxu0 0.0
    %333 = vmatprep.subr.mxu0 0.0
    %334 = vmatpush1.msra.mxu0 0.0
    %335 = vmatprep.subr.mxu0 0.0
    %336 = vmatpush1.msra.mxu0 0.0
    %337 = vmatprep.subr.mxu0 0.0
    %338 = vmatpush1.msra.mxu0 0.0
    %339 = vmatprep.subr.mxu0 0.0
    %340 = vmatpush1.msra.mxu0 0.0
    %341 = vmatprep.subr.mxu0 0.0
    %342 = vmatpush1.msra.mxu0 0.0
    %343 = vmatprep.subr.mxu0 0.0
    %344 = vmatpush1.msra.mxu0 0.0
    %345 = vmatprep.subr.mxu0 0.0
    %346 = vmatpush1.msra.mxu0 0.0
    %347 = vmatprep.subr.mxu0 0.0
    %348 = vmatpush1.msra.mxu0 0.0
    %349 = vmatprep.subr.mxu0 0.0
    %350 = vmatpush1.msra.mxu0 0.0
    %351 = vmatprep.subr.mxu0 0.0
    %352 = vmatpush1.msra.mxu0 0.0
    %353 = vmatprep.subr.mxu0 0.0
    %354 = vmatpush1.msra.mxu0 0.0
    %355 = vmatprep.subr.mxu0 0.0
    %356 = vmatpush1.msra.mxu0 0.0
    %357 = vmatprep.subr.mxu0 0.0
    %358 = vmatpush1.msra.mxu0 0.0
    %359 = vmatprep.subr.mxu0 0.0
    %360 = vmatpush1.msra.mxu0 0.0
    %361 = vmatprep.subr.mxu0 0.0
    %362 = vmatpush1.msra.mxu0 0.0
    %363 = vmatprep.subr.mxu0 0.0
    %364 = vmatpush1.msra.mxu0 0.0
    %365 = vmatprep.subr.mxu0 0.0
    %366 = vmatpush1.msra.mxu0 0.0
    %367 = vmatprep.subr.mxu0 0.0
    %368 = vmatpush1.msra.mxu0 0.0
    %369 = vmatprep.subr.mxu0 0.0
    %370 = vmatpush1.msra.mxu0 0.0
    %371 = vmatprep.subr.mxu0 0.0
    %372 = vmatpush1.msra.mxu0 0.0
    %373 = vmatprep.subr.mxu0 0.0
    %374 = vmatpush1.msra.mxu0 0.0
    %375 = vmatprep.subr.mxu0 0.0
    %376 = vmatpush1.msra.mxu0 0.0
    %377 = vmatprep.subr.mxu0 0.0
    %378 = vmatpush1.msra.mxu0 0.0
    %379 = vmatprep.subr.mxu0 0.0
    %380 = vmatpush1.msra.mxu0 0.0
    %381 = vmatprep.mubr.f32.mxu0 0.0
    %382 = vmatmul.mubr.f32.gmra.mrb[0].mxu0 %v306
    %v383 = vpop.f32.mrb[0].mxu0
    %v384 = vadd.f32 %v303, %v383
    %v385 = vpop.f32.mrb[0].mxu0
    %386 = vmatprep.mubr.f32.mxu0 0.0
    %387 = vmatmul.mubr.f32.gmra.mrb[0].mxu0 %v309
    %v388 = vpop.f32.mrb[0].mxu0
    %v389 = vadd.f32 %v303, %v388
    %v390 = vpop.f32.mrb[0].mxu0
    %391 = vmatprep.mubr.f32.mxu0 0.0
    %392 = vmatmul.mubr.f32.gmra.mrb[0].mxu0 %v312
    %v393 = vpop.f32.mrb[0].mxu0
    %v394 = vadd.f32 %v303, %v393
    %v395 = vpop.f32.mrb[0].mxu0
    %396 = vmatprep.mubr.f32.mxu0 0.0
    %397 = vmatmul.mubr.f32.gmra.mrb[0].mxu0 %v315
    %v398 = vpop.f32.mrb[0].mxu0
    %v399 = vadd.f32 %v303, %v398
    %v400 = vpop.f32.mrb[0].mxu0
    %401 = vdwg.mxu0
    %402 = vst [vmem:[#allocation8] sm:$0xff] %v384
    %403 = vst [vmem:[#allocation8 + $0x10] sm:$0xff] %v389
    %404 = vst [vmem:[#allocation8 + $0x20] sm:$0xff] %v394
    %405 = vst [vmem:[#allocation8 + $0x30] sm:$0xff] %v399
    %v406 = vlaneseq
    %v407 = vand.u32 %v406, 127
    %vm408 = vcmp.lt.s32.totalorder %v407, 8
    %v409 = vsel %vm408, %v384, 0.0
    %v410 = vsel %vm408, %v389, 0.0
    %v411 = vsel %vm408, %v394, 0.0
    %v412 = vsel %vm408, %v399, 0.0
    %v413 = vld [vmem:[#allocation5] sm:$0xff]
    %v414 = vld [vmem:[#allocation5 + $0x8] sm:$0xff]
    %v415 = vld [vmem:[#allocation5 + $0x10] sm:$0xff]
    %v416 = vld [vmem:[#allocation5 + $0x18] sm:$0xff]
    %v417 = vmul.f32 %v384, 0.5
    %v418 = vmul.f32 %v389, 0.5
    %v419 = vmul.f32 %v394, 0.5
    %v420 = vmul.f32 %v399, 0.5
    %v421 = vmul.f32 %v417, 1.442695
    %v422 = vpow.pop %v421
    %v423 = vmul.f32 %v418, 1.442695
    %v424 = vpow.pop %v423
    %v425 = vmul.f32 %v419, 1.442695
    %v426 = vpow.pop %v425
    %v427 = vmul.f32 %v420, 1.442695
    %v428 = vpow.pop %v427
    %v429 = vmul.f32 %v413, %v422
    %v430 = vmul.f32 %v414, %v424
    %v431 = vmul.f32 %v415, %v426
    %v432 = vmul.f32 %v416, %v428
    %v433 = vadd.f32 %v429, %v409
    %v434 = vadd.f32 %v430, %v410
    %v435 = vadd.f32 %v431, %v411
    %v436 = vadd.f32 %v432, %v412
    %v437 = vld [vmem:[#allocation7 + $0x50] sm:$0xff]
    %v438 = vld [vmem:[#allocation7 + $0x58] sm:$0xff]
    %v439 = vld [vmem:[#allocation7 + $0x88] sm:$0x1]
    %v440 = vlaneseq
    %v441 = vshrl.u32 %v440, 7
    %v442 = vsub.s32 0, %v441
    %v443 = vrot.slane %v439, %v442
    %v445 = vsel %vm304, %v433, 0
    %v448 = vsel %vm304, %v434, 0
    %v451 = vsel %vm304, %v435, 0
    %v454 = vsel %vm304, %v436, 0
    %456 = vmatprep.subr.mxu0 0.0
    %457 = vmatpush1.msra.mxu0 %v437
    %458 = vmatprep.subr.mxu0 0.0
    %459 = vmatpush1.msra.mxu0 %v438
    %460 = vmatprep.subr.mxu0 0.0
    %461 = vmatpush1.msra.mxu0 0.0
    %462 = vmatprep.subr.mxu0 0.0
    %463 = vmatpush1.msra.mxu0 0.0
    %464 = vmatprep.subr.mxu0 0.0
    %465 = vmatpush1.msra.mxu0 0.0
    %466 = vmatprep.subr.mxu0 0.0
    %467 = vmatpush1.msra.mxu0 0.0
    %468 = vmatprep.subr.mxu0 0.0
    %469 = vmatpush1.msra.mxu0 0.0
    %470 = vmatprep.subr.mxu0 0.0
    %471 = vmatpush1.msra.mxu0 0.0
    %472 = vmatprep.subr.mxu0 0.0
    %473 = vmatpush1.msra.mxu0 0.0
    %474 = vmatprep.subr.mxu0 0.0
    %475 = vmatpush1.msra.mxu0 0.0
    %476 = vmatprep.subr.mxu0 0.0
    %477 = vmatpush1.msra.mxu0 0.0
    %478 = vmatprep.subr.mxu0 0.0
    %479 = vmatpush1.msra.mxu0 0.0
    %480 = vmatprep.subr.mxu0 0.0
    %481 = vmatpush1.msra.mxu0 0.0
    %482 = vmatprep.subr.mxu0 0.0
    %483 = vmatpush1.msra.mxu0 0.0
    %484 = vmatprep.subr.mxu0 0.0
    %485 = vmatpush1.msra.mxu0 0.0
    %486 = vmatprep.subr.mxu0 0.0
    %487 = vmatpush1.msra.mxu0 0.0
    %488 = vmatprep.subr.mxu0 0.0
    %489 = vmatpush1.msra.mxu0 0.0
    %490 = vmatprep.subr.mxu0 0.0
    %491 = vmatpush1.msra.mxu0 0.0
    %492 = vmatprep.subr.mxu0 0.0
    %493 = vmatpush1.msra.mxu0 0.0
    %494 = vmatprep.subr.mxu0 0.0
    %495 = vmatpush1.msra.mxu0 0.0
    %496 = vmatprep.subr.mxu0 0.0
    %497 = vmatpush1.msra.mxu0 0.0
    %498 = vmatprep.subr.mxu0 0.0
    %499 = vmatpush1.msra.mxu0 0.0
    %500 = vmatprep.subr.mxu0 0.0
    %501 = vmatpush1.msra.mxu0 0.0
    %502 = vmatprep.subr.mxu0 0.0
    %503 = vmatpush1.msra.mxu0 0.0
    %504 = vmatprep.subr.mxu0 0.0
    %505 = vmatpush1.msra.mxu0 0.0
    %506 = vmatprep.subr.mxu0 0.0
    %507 = vmatpush1.msra.mxu0 0.0
    %508 = vmatprep.subr.mxu0 0.0
    %509 = vmatpush1.msra.mxu0 0.0
    %510 = vmatprep.subr.mxu0 0.0
    %511 = vmatpush1.msra.mxu0 0.0
    %512 = vmatprep.subr.mxu0 0.0
    %513 = vmatpush1.msra.mxu0 0.0
    %514 = vmatprep.subr.mxu0 0.0
    %515 = vmatpush1.msra.mxu0 0.0
    %516 = vmatprep.subr.mxu0 0.0
    %517 = vmatpush1.msra.mxu0 0.0
    %518 = vmatprep.subr.mxu0 0.0
    %519 = vmatpush1.msra.mxu0 0.0
    %520 = vmatprep.mubr.f32.mxu0 0.0
    %521 = vmatmul.mubr.f32.gmra.mrb[0].mxu0 %v445
    %v522 = vpop.f32.mrb[0].mxu0
    %v523 = vadd.f32 %v443, %v522
    %v524 = vpop.f32.mrb[0].mxu0
    %525 = vmatprep.mubr.f32.mxu0 0.0
    %526 = vmatmul.mubr.f32.gmra.mrb[0].mxu0 %v448
    %v527 = vpop.f32.mrb[0].mxu0
    %v528 = vadd.f32 %v443, %v527
    %v529 = vpop.f32.mrb[0].mxu0
    %530 = vmatprep.mubr.f32.mxu0 0.0
    %531 = vmatmul.mubr.f32.gmra.mrb[0].mxu0 %v451
    %v532 = vpop.f32.mrb[0].mxu0
    %v533 = vadd.f32 %v443, %v532
    %v534 = vpop.f32.mrb[0].mxu0
    %535 = vmatprep.mubr.f32.mxu0 0.0
    %536 = vmatmul.mubr.f32.gmra.mrb[0].mxu0 %v454
    %v537 = vpop.f32.mrb[0].mxu0
    %v538 = vadd.f32 %v443, %v537
    %v539 = vpop.f32.mrb[0].mxu0
    %540 = vdwg.mxu0
    %v541 = vld [vmem:[#allocation7 + $0x60] sm:$0xff]
    %v542 = vld [vmem:[#allocation7 + $0x68] sm:$0xff]
    %v543 = vld [vmem:[#allocation7 + $0x90] sm:$0x1]
    %v544 = vlaneseq
    %v545 = vshrl.u32 %v544, 7
    %v546 = vsub.s32 0, %v545
    %v547 = vrot.slane %v543, %v546
    %v549 = vsel %vm304, %v523, 0
    %v552 = vsel %vm304, %v528, 0
    %v555 = vsel %vm304, %v533, 0
    %v558 = vsel %vm304, %v538, 0
    %560 = vmatprep.subr.mxu0 0.0
    %561 = vmatpush1.msra.mxu0 %v541
    %562 = vmatprep.subr.mxu0 0.0
    %563 = vmatpush1.msra.mxu0 %v542
    %564 = vmatprep.subr.mxu0 0.0
    %565 = vmatpush1.msra.mxu0 0.0
    %566 = vmatprep.subr.mxu0 0.0
    %567 = vmatpush1.msra.mxu0 0.0
    %568 = vmatprep.subr.mxu0 0.0
    %569 = vmatpush1.msra.mxu0 0.0
    %570 = vmatprep.subr.mxu0 0.0
    %571 = vmatpush1.msra.mxu0 0.0
    %572 = vmatprep.subr.mxu0 0.0
    %573 = vmatpush1.msra.mxu0 0.0
    %574 = vmatprep.subr.mxu0 0.0
    %575 = vmatpush1.msra.mxu0 0.0
    %576 = vmatprep.subr.mxu0 0.0
    %577 = vmatpush1.msra.mxu0 0.0
    %578 = vmatprep.subr.mxu0 0.0
    %579 = vmatpush1.msra.mxu0 0.0
    %580 = vmatprep.subr.mxu0 0.0
    %581 = vmatpush1.msra.mxu0 0.0
    %582 = vmatprep.subr.mxu0 0.0
    %583 = vmatpush1.msra.mxu0 0.0
    %584 = vmatprep.subr.mxu0 0.0
    %585 = vmatpush1.msra.mxu0 0.0
    %586 = vmatprep.subr.mxu0 0.0
    %587 = vmatpush1.msra.mxu0 0.0
    %588 = vmatprep.subr.mxu0 0.0
    %589 = vmatpush1.msra.mxu0 0.0
    %590 = vmatprep.subr.mxu0 0.0
    %591 = vmatpush1.msra.mxu0 0.0
    %592 = vmatprep.subr.mxu0 0.0
    %593 = vmatpush1.msra.mxu0 0.0
    %594 = vmatprep.subr.mxu0 0.0
    %595 = vmatpush1.msra.mxu0 0.0
    %596 = vmatprep.subr.mxu0 0.0
    %597 = vmatpush1.msra.mxu0 0.0
    %598 = vmatprep.subr.mxu0 0.0
    %599 = vmatpush1.msra.mxu0 0.0
    %600 = vmatprep.subr.mxu0 0.0
    %601 = vmatpush1.msra.mxu0 0.0
    %602 = vmatprep.subr.mxu0 0.0
    %603 = vmatpush1.msra.mxu0 0.0
    %604 = vmatprep.subr.mxu0 0.0
    %605 = vmatpush1.msra.mxu0 0.0
    %606 = vmatprep.subr.mxu0 0.0
    %607 = vmatpush1.msra.mxu0 0.0
    %608 = vmatprep.subr.mxu0 0.0
    %609 = vmatpush1.msra.mxu0 0.0
    %610 = vmatprep.subr.mxu0 0.0
    %611 = vmatpush1.msra.mxu0 0.0
    %612 = vmatprep.subr.mxu0 0.0
    %613 = vmatpush1.msra.mxu0 0.0
    %614 = vmatprep.subr.mxu0 0.0
    %615 = vmatpush1.msra.mxu0 0.0
    %616 = vmatprep.subr.mxu0 0.0
    %617 = vmatpush1.msra.mxu0 0.0
    %618 = vmatprep.subr.mxu0 0.0
    %619 = vmatpush1.msra.mxu0 0.0
    %620 = vmatprep.subr.mxu0 0.0
    %621 = vmatpush1.msra.mxu0 0.0
    %622 = vmatprep.subr.mxu0 0.0
    %623 = vmatpush1.msra.mxu0 0.0
    %624 = vmatprep.mubr.f32.mxu0 0.0
    %625 = vmatmul.mubr.f32.gmra.mrb[0].mxu0 %v549
    %v626 = vpop.f32.mrb[0].mxu0
    %v627 = vadd.f32 %v547, %v626
    %v628 = vpop.f32.mrb[0].mxu0
    %629 = vmatprep.mubr.f32.mxu0 0.0
    %630 = vmatmul.mubr.f32.gmra.mrb[0].mxu0 %v552
    %v631 = vpop.f32.mrb[0].mxu0
    %v632 = vadd.f32 %v547, %v631
    %v633 = vpop.f32.mrb[0].mxu0
    %634 = vmatprep.mubr.f32.mxu0 0.0
    %635 = vmatmul.mubr.f32.gmra.mrb[0].mxu0 %v555
    %v636 = vpop.f32.mrb[0].mxu0
    %v637 = vadd.f32 %v547, %v636
    %v638 = vpop.f32.mrb[0].mxu0
    %639 = vmatprep.mubr.f32.mxu0 0.0
    %640 = vmatmul.mubr.f32.gmra.mrb[0].mxu0 %v558
    %v641 = vpop.f32.mrb[0].mxu0
    %v642 = vadd.f32 %v547, %v641
    %v643 = vpop.f32.mrb[0].mxu0
    %644 = vdwg.mxu0
    %vm645 = vcmp.gt.f32.partialorder %v627, 0.0
    %vm646 = vcmp.gt.f32.partialorder %v632, 0.0
    %vm647 = vcmp.gt.f32.partialorder %v637, 0.0
    %vm648 = vcmp.gt.f32.partialorder %v642, 0.0
    %v649 = vmul.f32 %v627, 0.01
    %v650 = vmul.f32 %v632, 0.01
    %v651 = vmul.f32 %v637, 0.01
    %v652 = vmul.f32 %v642, 0.01
    %v653 = vsel %vm645, %v627, %v649
    %v654 = vsel %vm646, %v632, %v650
    %v655 = vsel %vm647, %v637, %v651
    %v656 = vsel %vm648, %v642, %v652
    %657 = vst [vmem:[#allocation8 + $0x8] sm:$0xff] %v653
    %658 = vst [vmem:[#allocation8 + $0x18] sm:$0xff] %v654
    %659 = vst [vmem:[#allocation8 + $0x28] sm:$0xff] %v655
    %660 = vst [vmem:[#allocation8 + $0x38] sm:$0xff] %v656
    // Predicated region
    $region26: #{tpu_custom_call.1} parent=1 // pred_check
      _
    $region27: #{tpu_custom_call.1} parent=1 // pred_check_branch
      %662 = sbr.rel (0) target = $region29
    $region28: #{tpu_custom_call.1} parent=1 // pred_region
      %s664 = ssub.s32 1024, 1024
      %665 = vsyncadd [#allocation4], %s664
      %s666 = sshll.u32 [#allocation8], 4
      %s667 = int_to_ptr.vmem [resolvable:$true] %s666
      %672 = dma.vmem_to_hbm [thread:$0]  %s667, 1024, %s3, [#allocation4], 256, 256, 16
    $region29: #{tpu_custom_call.1} parent=1 // pred_fallthru
      _
    // Predicated region
    $region30: #{tpu_custom_call.1} parent=1 // pred_check
      _
    $region31: #{tpu_custom_call.1} parent=1 // pred_check_branch
      %674 = sbr.rel (0) target = $region33
    $region32: #{tpu_custom_call.1} parent=1 // pred_region
      %675 = dma.done [#allocation4], 1024
    $region33: #{tpu_custom_call.1} parent=1 // pred_fallthru
      _
    %676 = vsyncpa [#allocation3], 1
    %677 = vsyncpa [#allocation6], 1
    %678 = vsyncpa [#allocation4], 1

</llo_original>
